<compile_context>
chip_gen: v6e
topology: v6e:2x2x1
jax: 0.10.0
libtpu: 0.0.40
codegen_flags: <defaults>
</compile_context>

<pallas_src>
import functools

import jax
import jax.numpy as jnp
from jax.experimental import pallas as pl
from jax.experimental.pallas import tpu as pltpu

_LANE = 128
_ROW_ALIGN = 16  # bf16 packs two rows per sublane


def _round_up(x, m):
    return (x + m - 1) // m * m


def _cdiv(a, b):
    return -(-a // b)


def _vmem_capacity_bytes():
    try:
        return int(pltpu.get_tpu_info().vmem_capacity_bytes)
    except Exception:
        return 128 << 20  # v5e / v6e size; v7x reports 64 MiB itself


# ---------------------------------------------------------------------------
# Kernels
# ---------------------------------------------------------------------------
def _ffn_resident_kernel(x_ref, w1_ref, b1_ref, w2_ref, b2_ref, o_ref, *, cdt):
    """Whole FFN; W1/W2/b1/b2 resident in VMEM, grid over row tiles only."""
    xb = x_ref[...].astype(cdt)  # in-kernel cast, hides under the MXU
    h = jnp.dot(xb, w1_ref[...], preferred_element_type=jnp.float32)
    h = jnp.maximum(h + b1_ref[...], 0.0)  # bias + ReLU in f32
    y = jnp.dot(h.astype(w2_ref.dtype), w2_ref[...],
                preferred_element_type=jnp.float32)
    o_ref[...] = (y + b2_ref[...]).astype(o_ref.dtype)


def _ffn_stream_kernel(x_ref, w1_ref, b1_ref, w2_ref, b2_ref, o_ref, acc_ref,
                       *, cdt):
    """H-chunked reduction: acc += relu(x @ W1[:,hc] + b1[hc]) @ W2[hc,:]."""
    k = pl.program_id(1)

    @pl.when(k == 0)
    def _():
        acc_ref[...] = jnp.zeros_like(acc_ref)

    xb = x_ref[...].astype(cdt)
    h = jnp.dot(xb, w1_ref[...], preferred_element_type=jnp.float32)
    h = jnp.maximum(h + b1_ref[...], 0.0)
    acc_ref[...] += jnp.dot(h.astype(w2_ref.dtype), w2_ref[...],
                            preferred_element_type=jnp.float32)

    @pl.when(k == pl.num_programs(1) - 1)
    def _():
        o_ref[...] = (acc_ref[...] + b2_ref[...]).astype(o_ref.dtype)


# ---------------------------------------------------------------------------
# Wrapper
# ---------------------------------------------------------------------------
def feedforward_net(x, w1, b1, w2, b2, *, tm=None,
                    compute_dtype=jnp.bfloat16,
                    out_dtype=None,
                    h_chunk=None,
                    single_buffer_weights=True):
    """x: (B, S, E); w1: (E, H); b1: (1, H); w2: (H, E); b2: (1, E)."""
    B, S, E = x.shape
    H = w1.shape[1]
    M = B * S

    cdt = jnp.dtype(compute_dtype)
    odt = jnp.dtype(out_dtype) if out_dtype is not None else jnp.dtype(x.dtype)
    xbytes = jnp.dtype(x.dtype).itemsize

    cap = _vmem_capacity_bytes()
    # Generation-aware scoped-VMEM ceiling: ~48 MiB on v7x, ~100 MiB on v5e/v6e.
    vmem_cap = int(min(max(cap - (16 << 20), 32 << 20), 100 << 20))

    Ep = _round_up(E, _LANE)
    Hp = _round_up(H, _LANE)

    # ---- row tile ---------------------------------------------------------
    if tm is None:
        tm = 512 if cap >= (96 << 20) else 256  # bigger tiles on 128-MiB parts
    tm = max(_ROW_ALIGN, _round_up(tm, _ROW_ALIGN))
    tm = min(tm, _round_up(M, _ROW_ALIGN))

    def _vmem_resident(tm_):
        wb = 1 if single_buffer_weights else 2
        return (wb * 2 * Ep * Hp * cdt.itemsize      # W1 + W2 resident
                + wb * (Hp + Ep) * 4                 # b1 + b2 (f32)
                + 2 * tm_ * Ep * xbytes              # x tiles (double-buffered)
                + 2 * tm_ * Ep * odt.itemsize        # out tiles
                + tm_ * Hp * (4 + cdt.itemsize))     # hidden f32 + cast copy

    def _vmem_stream(tm_, hc_):
        return (2 * 2 * Ep * hc_ * cdt.itemsize      # W1/W2 chunks, dbl-buffered
                + 2 * hc_ * 4 + Ep * 4               # b1 chunks + b2
                + 2 * tm_ * Ep * xbytes              # x tiles
                + 2 * tm_ * Ep * odt.itemsize        # out tiles
                + tm_ * Ep * 4                       # f32 accumulator scratch
                + tm_ * hc_ * (4 + cdt.itemsize))    # hidden live range

    stream = (h_chunk is not None) or (_vmem_resident(tm) + (8 << 20) > vmem_cap)

    if stream:
        hc = h_chunk if h_chunk is not None else 512
        hc = _round_up(min(max(hc, _LANE), Hp), _LANE)
        # Shrink the H chunk / row tile until the streamed working set fits.
        while _vmem_stream(tm, hc) + (8 << 20) > vmem_cap and hc > _LANE:
            hc = max(_LANE, hc // 2)
        while _vmem_stream(tm, hc) + (8 << 20) > vmem_cap and tm > _ROW_ALIGN:
            tm = max(_ROW_ALIGN, _round_up(tm // 2, _ROW_ALIGN))
        Hp = _round_up(Hp, hc)  # chunks divide evenly; padded region is zeros
        nk = Hp // hc
    else:
        hc = Hp
        nk = 1

    # >=2 row tiles when there is enough work (v7x megacore), and re-balance
    # the tile so the ragged last tile wastes as few rows as possible.
    nt = _cdiv(M, tm)
    if nt == 1 and M >= 2 * _LANE:
        nt = 2
    tm = _round_up(_cdiv(M, nt), _ROW_ALIGN)
    nt = _cdiv(M, tm)

    # ---- operands: only pad what actually needs padding --------------------
    x2d = x.reshape(M, E)  # rows stay ragged: Pallas masks the edge tile
    if Ep != E:
        x2d = jnp.pad(x2d, ((0, 0), (0, Ep - E)))
    w1p = jnp.pad(w1.astype(cdt), ((0, Ep - E), (0, Hp - H)))
    w2p = jnp.pad(w2.astype(cdt), ((0, Hp - H), (0, Ep - E)))
    b1p = jnp.pad(b1.astype(jnp.float32), ((0, 0), (0, Hp - H)))
    b2p = jnp.pad(b2.astype(jnp.float32), ((0, 0), (0, Ep - E)))

    vmem_needed = _vmem_stream(tm, hc) if stream else _vmem_resident(tm)
    vmem_limit = int(min(max(vmem_needed + (8 << 20), 32 << 20), vmem_cap))

    weight_bytes = 2 * Ep * Hp * cdt.itemsize + (Hp + Ep) * 4
    weight_reads = nt if stream else 1  # streamed weights re-read per row tile
    cost = pl.CostEstimate(
        flops=int(4 * nt * tm * Ep * Hp),
        transcendentals=0,
        bytes_accessed=int(M * Ep * xbytes
                           + weight_reads * weight_bytes
                           + M * Ep * odt.itemsize),
    )

    def _const(shape):
        idx = lambda i: (0,) * len(shape)
        if single_buffer_weights:
            # Grid-invariant operand: keep a single VMEM copy.
            return pl.BlockSpec(shape, idx, pipeline_mode=pl.Buffered(1))
        return pl.BlockSpec(shape, idx)

    if stream:
        kernel = functools.partial(_ffn_stream_kernel, cdt=cdt)
        grid = (nt, nk)
        in_specs = [
            pl.BlockSpec((tm, Ep), lambda i, k: (i, 0)),   # x rows (held across k)
            pl.BlockSpec((Ep, hc), lambda i, k: (0, k)),   # W1 column chunk
            pl.BlockSpec((1, hc), lambda i, k: (0, k)),    # b1 chunk
            pl.BlockSpec((hc, Ep), lambda i, k: (k, 0)),   # W2 row chunk
            pl.BlockSpec((1, Ep), lambda i, k: (0, 0)),    # b2
        ]
        out_specs = pl.BlockSpec((tm, Ep), lambda i, k: (i, 0))
        scratch = [pltpu.VMEM((tm, Ep), jnp.float32)]
        dims = ("parallel", "arbitrary")
    else:
        kernel = functools.partial(_ffn_resident_kernel, cdt=cdt)
        grid = (nt,)
        in_specs = [
            pl.BlockSpec((tm, Ep), lambda i: (i, 0)),      # x rows (pipelined)
            _const((Ep, Hp)),                              # W1 (resident)
            _const((1, Hp)),                               # b1
            _const((Hp, Ep)),                              # W2
            _const((1, Ep)),                               # b2
        ]
        out_specs = pl.BlockSpec((tm, Ep), lambda i: (i, 0))
        scratch = []
        dims = ("parallel",)

    out2d = pl.pallas_call(
        kernel,
        out_shape=jax.ShapeDtypeStruct((M, Ep), odt),
        grid_spec=pltpu.PrefetchScalarGridSpec(
            num_scalar_prefetch=0,
            grid=grid,
            in_specs=in_specs,
            out_specs=out_specs,
            scratch_shapes=scratch,
        ),
        compiler_params=pltpu.CompilerParams(
            dimension_semantics=dims,
            vmem_limit_bytes=vmem_limit,
        ),
        cost_estimate=cost,
    )(x2d, w1p, b1p, w2p, b2p)

    if Ep != E:
        out2d = out2d[:, :E]
    return out2d.reshape(B, S, E)


def init_params(key, embed_size, hidden_size):
    """Deterministic init mimicking PyTorch nn.Linear (uniform +-1/sqrt(fan_in))."""
    k1, k2, k3, k4 = jax.random.split(key, 4)
    bound1 = 1.0 / (embed_size ** 0.5)
    bound2 = 1.0 / (hidden_size ** 0.5)
    w1 = jax.random.uniform(k1, (embed_size, hidden_size), jnp.float32, -bound1, bound1)
    b1 = jax.random.uniform(k2, (1, hidden_size), jnp.float32, -bound1, bound1)
    w2 = jax.random.uniform(k3, (hidden_size, embed_size), jnp.float32, -bound2, bound2)
    b2 = jax.random.uniform(k4, (1, embed_size), jnp.float32, -bound2, bound2)
    return w1, b1, w2, b2


if __name__ == "__main__":
    key = jax.random.PRNGKey(0)
    kx1, kp1, kx2, kp2 = jax.random.split(key, 4)

    def run(x, params, **kw):
        fn = jax.jit(functools.partial(feedforward_net, **kw))
        return jax.block_until_ready(fn(x, *params))

    # --- Case A: tiny FFN -> resident-weight path ---------------------------
    B, S, E, H = 2, 8, 32, 64
    xa = jax.random.normal(kx1, (B, S, E), jnp.float32)
    pa = init_params(kp1, E, H)
    ref_a = jnp.maximum(xa @ pa[0] + pa[1][0], 0.0) @ pa[2] + pa[3][0]

    try:
        out_a_bf16 = run(xa, pa, compute_dtype=jnp.bfloat16,
                         single_buffer_weights=True)
    except Exception:
        # Fallback if this jax version rejects pl.Buffered(1) single-buffering.
        out_a_bf16 = run(xa, pa, compute_dtype=jnp.bfloat16,
                         single_buffer_weights=False)
    out_a_f32 = run(xa, pa, compute_dtype=jnp.float32,
                    single_buffer_weights=False)

    assert out_a_bf16.shape == (B, S, E) and out_a_f32.shape == (B, S, E)
    assert jnp.allclose(out_a_f32, ref_a, atol=1e-5, rtol=1e-5)
    assert jnp.allclose(out_a_bf16, ref_a, atol=5e-2, rtol=5e-2)

    # --- Case B: forced H-streaming path (3 chunks of 128) ------------------
    E2, H2 = 128, 384
    xb = jax.random.normal(kx2, (B, S, E2), jnp.float32)
    pb = init_params(kp2, E2, H2)
    ref_b = jnp.maximum(xb @ pb[0] + pb[1][0], 0.0) @ pb[2] + pb[3][0]

    out_b_f32 = run(xb, pb, compute_dtype=jnp.float32, h_chunk=128,
                    single_buffer_weights=False)
    out_b_bf16 = run(xb, pb, compute_dtype=jnp.bfloat16, h_chunk=128,
                     single_buffer_weights=False)

    assert out_b_f32.shape == (B, S, E2) and out_b_bf16.shape == (B, S, E2)
    assert jnp.allclose(out_b_f32, ref_b, atol=2e-3, rtol=2e-3)
    assert jnp.allclose(out_b_bf16, ref_b, atol=5e-2, rtol=5e-2)

    print("KERNEL_OK")
</pallas_src>

<mosaic_0001>
module attributes {stable_mosaic.version = 11 : i64} {
  func.func @_ffn_resident_kernel(%arg0: i32, %arg1: memref<16x128xf32, #tpu.memory_space<vmem>>, %arg2: memref<128x128xbf16, #tpu.memory_space<vmem>>, %arg3: memref<1x128xf32, #tpu.memory_space<vmem>>, %arg4: memref<128x128xbf16, #tpu.memory_space<vmem>>, %arg5: memref<1x128xf32, #tpu.memory_space<vmem>>, %arg6: memref<16x128xf32, #tpu.memory_space<vmem>>) attributes {dimension_semantics = [#tpu.dimension_semantics<parallel>], iteration_bounds = array<i64: 1>, scalar_prefetch = 0 : i64, scratch_operands = 0 : i64, tpu.core_type = #tpu.core_type<tc>, window_params = [{transform_indices = @transform_0, window_bounds = array<i64: 16, 128>}, {pipeline_mode = #tpu.pipeline_mode<synchronous>, transform_indices = @transform_1, window_bounds = array<i64: 128, 128>}, {pipeline_mode = #tpu.pipeline_mode<synchronous>, transform_indices = @transform_2, window_bounds = array<i64: 1, 128>}, {pipeline_mode = #tpu.pipeline_mode<synchronous>, transform_indices = @transform_3, window_bounds = array<i64: 128, 128>}, {pipeline_mode = #tpu.pipeline_mode<synchronous>, transform_indices = @transform_4, window_bounds = array<i64: 1, 128>}, {transform_indices = @transform_5, window_bounds = array<i64: 16, 128>}]} {
    %c0 = arith.constant 0 : index
    %c0_0 = arith.constant 0 : index
    %0 = vector.load %arg1[%c0, %c0_0] : memref<16x128xf32, #tpu.memory_space<vmem>>, vector<16x128xf32>
    %1 = arith.truncf %0 : vector<16x128xf32> to vector<16x128xbf16>
    %c0_1 = arith.constant 0 : index
    %c0_2 = arith.constant 0 : index
    %2 = vector.load %arg2[%c0_1, %c0_2] : memref<128x128xbf16, #tpu.memory_space<vmem>>, vector<128x128xbf16>
    %cst = arith.constant dense<0.000000e+00> : vector<16x128xf32>
    %3 = tpu.matmul %1, %2, %cst {dimension_numbers = #tpu.dot_dimension_numbers<[1], [0], [0], [1], [0, 0, 1, 1], [], []>} : vector<16x128xbf16>, vector<128x128xbf16>, vector<16x128xf32> -> vector<16x128xf32>
    %c0_3 = arith.constant 0 : index
    %c0_4 = arith.constant 0 : index
    %4 = vector.load %arg3[%c0_3, %c0_4] : memref<1x128xf32, #tpu.memory_space<vmem>>, vector<1x128xf32>
    %5 = vector.broadcast %4 : vector<1x128xf32> to vector<16x128xf32>
    %6 = arith.addf %3, %5 : vector<16x128xf32>
    %cst_5 = arith.constant 0.000000e+00 : f32
    %7 = vector.broadcast %cst_5 : f32 to vector<16x128xf32>
    %8 = arith.maximumf %6, %7 : vector<16x128xf32>
    %9 = arith.truncf %8 : vector<16x128xf32> to vector<16x128xbf16>
    %c0_6 = arith.constant 0 : index
    %c0_7 = arith.constant 0 : index
    %10 = vector.load %arg4[%c0_6, %c0_7] : memref<128x128xbf16, #tpu.memory_space<vmem>>, vector<128x128xbf16>
    %cst_8 = arith.constant dense<0.000000e+00> : vector<16x128xf32>
    %11 = tpu.matmul %9, %10, %cst_8 {dimension_numbers = #tpu.dot_dimension_numbers<[1], [0], [0], [1], [0, 0, 1, 1], [], []>} : vector<16x128xbf16>, vector<128x128xbf16>, vector<16x128xf32> -> vector<16x128xf32>
    %c0_9 = arith.constant 0 : index
    %c0_10 = arith.constant 0 : index
    %12 = vector.load %arg5[%c0_9, %c0_10] : memref<1x128xf32, #tpu.memory_space<vmem>>, vector<1x128xf32>
    %13 = vector.broadcast %12 : vector<1x128xf32> to vector<16x128xf32>
    %14 = arith.addf %11, %13 : vector<16x128xf32>
    %c0_11 = arith.constant 0 : index
    %c0_12 = arith.constant 0 : index
    %15 = vector.load %arg6[%c0_11, %c0_12] : memref<16x128xf32, #tpu.memory_space<vmem>>, vector<16x128xf32>
    tpu.vector_store %arg6[%c0_11, %c0_12], %14 {strides = array<i32>} : memref<16x128xf32, #tpu.memory_space<vmem>>, vector<16x128xf32>,
    return
  }
  func.func @transform_0(%arg0: i32) -> (i32, i32) {
    %c0_i32 = arith.constant 0 : i32
    %c0_i32_0 = arith.constant 0 : i32
    return %arg0, %c0_i32 : i32, i32
  }
  func.func @transform_1(%arg0: i32) -> (i32, i32) {
    %c0_i32 = arith.constant 0 : i32
    %c0_i32_0 = arith.constant 0 : i32
    %c0_i32_1 = arith.constant 0 : i32
    return %c0_i32, %c0_i32_0 : i32, i32
  }
  func.func @transform_2(%arg0: i32) -> (i32, i32) {
    %c0_i32 = arith.constant 0 : i32
    %c0_i32_0 = arith.constant 0 : i32
    %c0_i32_1 = arith.constant 0 : i32
    return %c0_i32, %c0_i32_0 : i32, i32
  }
  func.func @transform_3(%arg0: i32) -> (i32, i32) {
    %c0_i32 = arith.constant 0 : i32
    %c0_i32_0 = arith.constant 0 : i32
    %c0_i32_1 = arith.constant 0 : i32
    return %c0_i32, %c0_i32_0 : i32, i32
  }
  func.func @transform_4(%arg0: i32) -> (i32, i32) {
    %c0_i32 = arith.constant 0 : i32
    %c0_i32_0 = arith.constant 0 : i32
    %c0_i32_1 = arith.constant 0 : i32
    return %c0_i32, %c0_i32_0 : i32, i32
  }
  func.func @transform_5(%arg0: i32) -> (i32, i32) {
    %c0_i32 = arith.constant 0 : i32
    %c0_i32_0 = arith.constant 0 : i32
    return %arg0, %c0_i32 : i32, i32
  }
}

module attributes {stable_mosaic.version = 11 : i64} {
  func.func @_ffn_resident_kernel(%arg0: i32, %arg1: memref<16x128xf32, #tpu.memory_space<vmem>>, %arg2: memref<128x128xbf16, #tpu.memory_space<vmem>>, %arg3: memref<1x128xf32, #tpu.memory_space<vmem>>, %arg4: memref<128x128xbf16, #tpu.memory_space<vmem>>, %arg5: memref<1x128xf32, #tpu.memory_space<vmem>>, %arg6: memref<16x128xf32, #tpu.memory_space<vmem>>) attributes {dimension_semantics = [#tpu.dimension_semantics<parallel>], iteration_bounds = array<i64: 1>, scalar_prefetch = 0 : i64, scratch_operands = 0 : i64, tpu.core_type = #tpu.core_type<tc>, window_params = [{transform_indices = @transform_0, window_bounds = array<i64: 16, 128>}, {pipeline_mode = #tpu.pipeline_mode<synchronous>, transform_indices = @transform_1, window_bounds = array<i64: 128, 128>}, {pipeline_mode = #tpu.pipeline_mode<synchronous>, transform_indices = @transform_2, window_bounds = array<i64: 1, 128>}, {pipeline_mode = #tpu.pipeline_mode<synchronous>, transform_indices = @transform_3, window_bounds = array<i64: 128, 128>}, {pipeline_mode = #tpu.pipeline_mode<synchronous>, transform_indices = @transform_4, window_bounds = array<i64: 1, 128>}, {transform_indices = @transform_5, window_bounds = array<i64: 16, 128>}]} {
    %c0 = arith.constant 0 : index
    %c0_0 = arith.constant 0 : index
    %0 = vector.load %arg1[%c0, %c0_0] : memref<16x128xf32, #tpu.memory_space<vmem>>, vector<16x128xf32>
    %1 = arith.truncf %0 : vector<16x128xf32> to vector<16x128xbf16>
    %c0_1 = arith.constant 0 : index
    %c0_2 = arith.constant 0 : index
    %2 = vector.load %arg2[%c0_1, %c0_2] : memref<128x128xbf16, #tpu.memory_space<vmem>>, vector<128x128xbf16>
    %cst = arith.constant dense<0.000000e+00> : vector<16x128xf32>
    %3 = tpu.matmul %1, %2, %cst {dimension_numbers = #tpu.dot_dimension_numbers<[1], [0], [0], [1], [0, 0, 1, 1], [], []>} : vector<16x128xbf16>, vector<128x128xbf16>, vector<16x128xf32> -> vector<16x128xf32>
    %c0_3 = arith.constant 0 : index
    %c0_4 = arith.constant 0 : index
    %4 = vector.load %arg3[%c0_3, %c0_4] : memref<1x128xf32, #tpu.memory_space<vmem>>, vector<1x128xf32>
    %5 = vector.broadcast %4 : vector<1x128xf32> to vector<16x128xf32>
    %6 = arith.addf %3, %5 : vector<16x128xf32>
    %cst_5 = arith.constant 0.000000e+00 : f32
    %7 = vector.broadcast %cst_5 : f32 to vector<16x128xf32>
    %8 = arith.maximumf %6, %7 : vector<16x128xf32>
    %9 = arith.truncf %8 : vector<16x128xf32> to vector<16x128xbf16>
    %c0_6 = arith.constant 0 : index
    %c0_7 = arith.constant 0 : index
    %10 = vector.load %arg4[%c0_6, %c0_7] : memref<128x128xbf16, #tpu.memory_space<vmem>>, vector<128x128xbf16>
    %cst_8 = arith.constant dense<0.000000e+00> : vector<16x128xf32>
    %11 = tpu.matmul %9, %10, %cst_8 {dimension_numbers = #tpu.dot_dimension_numbers<[1], [0], [0], [1], [0, 0, 1, 1], [], []>} : vector<16x128xbf16>, vector<128x128xbf16>, vector<16x128xf32> -> vector<16x128xf32>
    %c0_9 = arith.constant 0 : index
    %c0_10 = arith.constant 0 : index
    %12 = vector.load %arg5[%c0_9, %c0_10] : memref<1x128xf32, #tpu.memory_space<vmem>>, vector<1x128xf32>
    %13 = vector.broadcast %12 : vector<1x128xf32> to vector<16x128xf32>
    %14 = arith.addf %11, %13 : vector<16x128xf32>
    %c0_11 = arith.constant 0 : index
    %c0_12 = arith.constant 0 : index
    %15 = vector.load %arg6[%c0_11, %c0_12] : memref<16x128xf32, #tpu.memory_space<vmem>>, vector<16x128xf32>
    tpu.vector_store %arg6[%c0_11, %c0_12], %14 {strides = array<i32>} : memref<16x128xf32, #tpu.memory_space<vmem>>, vector<16x128xf32>,
    return
  }
  func.func @transform_0(%arg0: i32) -> (i32, i32) {
    %c0_i32 = arith.constant 0 : i32
    %c0_i32_0 = arith.constant 0 : i32
    return %arg0, %c0_i32 : i32, i32
  }
  func.func @transform_1(%arg0: i32) -> (i32, i32) {
    %c0_i32 = arith.constant 0 : i32
    %c0_i32_0 = arith.constant 0 : i32
    %c0_i32_1 = arith.constant 0 : i32
    return %c0_i32, %c0_i32_0 : i32, i32
  }
  func.func @transform_2(%arg0: i32) -> (i32, i32) {
    %c0_i32 = arith.constant 0 : i32
    %c0_i32_0 = arith.constant 0 : i32
    %c0_i32_1 = arith.constant 0 : i32
    return %c0_i32, %c0_i32_0 : i32, i32
  }
  func.func @transform_3(%arg0: i32) -> (i32, i32) {
    %c0_i32 = arith.constant 0 : i32
    %c0_i32_0 = arith.constant 0 : i32
    %c0_i32_1 = arith.constant 0 : i32
    return %c0_i32, %c0_i32_0 : i32, i32
  }
  func.func @transform_4(%arg0: i32) -> (i32, i32) {
    %c0_i32 = arith.constant 0 : i32
    %c0_i32_0 = arith.constant 0 : i32
    %c0_i32_1 = arith.constant 0 : i32
    return %c0_i32, %c0_i32_0 : i32, i32
  }
  func.func @transform_5(%arg0: i32) -> (i32, i32) {
    %c0_i32 = arith.constant 0 : i32
    %c0_i32_0 = arith.constant 0 : i32
    return %arg0, %c0_i32 : i32, i32
  }
}

</mosaic_0001>

<llo_original>
// kernel: feedforward_net.1
$region0: #{feedforward_net.1}
  #allocation0 [shape = 'u32[]', space=smem, size = 0x4, offset = 0x4, fixed_abs, tag = 'smem constant byte address 0x4 - core index']
  #allocation1 [shape = 'u32[144,128]{1,0:T(1,128)}', space=vmem, size = 0x12000, scoped, tag = 'internal scratch']
  %s0 = inlined_call_operand.vmem [shape: f32[16,128], index: 0, kind: input, shape index: {}]
  %s1 = inlined_call_operand.vmem [shape: bf16[128,128], index: 1, kind: input, shape index: {}]
  %s2 = inlined_call_operand.vmem [shape: f32[1,128], index: 2, kind: input, shape index: {}]
  %s3 = inlined_call_operand.vmem [shape: bf16[128,128], index: 3, kind: input, shape index: {}]
  %s4 = inlined_call_operand.vmem [shape: f32[1,128], index: 4, kind: input, shape index: {}]
  %s5 = inlined_call_operand.vmem [shape: f32[16,128], index: 5, kind: output, shape index: {}]
  %s6 = sld [smem:[#allocation0]]
  $region30: #{feedforward_net.1} parent=0
    _
  %s8 = ssub.s32 1, %s6
  %s9 = scalar_select 0, %s8, %s6
  // Predicated region
  $region2: #{feedforward_net.1} parent=0 // pred_check
    _
  $region3: #{feedforward_net.1} parent=0 // pred_check_branch
    %11 = sbr.rel (0) target = $region5
  $region4: #{feedforward_net.1} parent=0 // pred_region
    _
  $region5: #{feedforward_net.1} parent=0 // pred_fallthru
    _
  // Predicated region
  $region6: #{feedforward_net.1} parent=0 // pred_check
    _
  $region7: #{feedforward_net.1} parent=0 // pred_check_branch
    %13 = sbr.rel (0) target = $region9
  $region8: #{feedforward_net.1} parent=0 // pred_region
    _
  $region9: #{feedforward_net.1} parent=0 // pred_fallthru
    _
  // Predicated region
  $region10: #{feedforward_net.1} parent=0 // pred_check
    _
  $region11: #{feedforward_net.1} parent=0 // pred_check_branch
    %15 = sbr.rel (0) target = $region13
  $region12: #{feedforward_net.1} parent=0 // pred_region
    _
  $region13: #{feedforward_net.1} parent=0 // pred_fallthru
    _
  // Predicated region
  $region14: #{feedforward_net.1} parent=0 // pred_check
    _
  $region15: #{feedforward_net.1} parent=0 // pred_check_branch
    %17 = sbr.rel (0) target = $region17
  $region16: #{feedforward_net.1} parent=0 // pred_region
    _
  $region17: #{feedforward_net.1} parent=0 // pred_fallthru
    _
  // Predicated region
  $region18: #{feedforward_net.1} parent=0 // pred_check
    _
  $region19: #{feedforward_net.1} parent=0 // pred_check_branch
    %19 = sbr.rel (0) target = $region21
  $region20: #{feedforward_net.1} parent=0 // pred_region
    _
  $region21: #{feedforward_net.1} parent=0 // pred_fallthru
    _
  %v21 = vld [vmem:[%s0] sm:$0xff]
  %v22 = vld [vmem:[%s0 + $0x8] sm:$0xff]
  %v23 = vpack.c.bf16 %v22, %v21
  %v24 = vld [vmem:[%s1] sm:$0xf]
  %v25 = vld [vmem:[%s1 + $0x4] sm:$0xf]
  %v26 = vld [vmem:[%s1 + $0x8] sm:$0xf]
  %v27 = vld [vmem:[%s1 + $0xc] sm:$0xf]
  %v28 = vld [vmem:[%s1 + $0x10] sm:$0xf]
  %v29 = vld [vmem:[%s1 + $0x14] sm:$0xf]
  %v30 = vld [vmem:[%s1 + $0x18] sm:$0xf]
  %v31 = vld [vmem:[%s1 + $0x1c] sm:$0xf]
  %v32 = vld [vmem:[%s1 + $0x20] sm:$0xf]
  %v33 = vld [vmem:[%s1 + $0x24] sm:$0xf]
  %v34 = vld [vmem:[%s1 + $0x28] sm:$0xf]
  %v35 = vld [vmem:[%s1 + $0x2c] sm:$0xf]
  %v36 = vld [vmem:[%s1 + $0x30] sm:$0xf]
  %v37 = vld [vmem:[%s1 + $0x34] sm:$0xf]
  %v38 = vld [vmem:[%s1 + $0x38] sm:$0xf]
  %v39 = vld [vmem:[%s1 + $0x3c] sm:$0xf]
  %v40 = vld [vmem:[%s2] sm:$0x1]
  %v42 = vlaneseq
  %v43 = vshrl.u32 %v42, 7
  %v44 = vsub.s32 0, %v43
  %v45 = vrot.slane %v40, %v44
  %v63 = vunpack.c.l.b16 %v24
  %v64 = vunpack.c.l.b16 %v25
  %v65 = vunpack.c.l.b16 %v26
  %v66 = vunpack.c.l.b16 %v27
  %v67 = vunpack.c.l.b16 %v28
  %v68 = vunpack.c.l.b16 %v29
  %v69 = vunpack.c.l.b16 %v30
  %v70 = vunpack.c.l.b16 %v31
  %v71 = vunpack.c.l.b16 %v32
  %v72 = vunpack.c.l.b16 %v33
  %v73 = vunpack.c.l.b16 %v34
  %v74 = vunpack.c.l.b16 %v35
  %v75 = vunpack.c.l.b16 %v36
  %v76 = vunpack.c.l.b16 %v37
  %v77 = vunpack.c.l.b16 %v38
  %v78 = vunpack.c.l.b16 %v39
  %v79 = vpack.c.b16 %v64, %v63
  %v80 = vpack.c.b16 %v66, %v65
  %v81 = vpack.c.b16 %v68, %v67
  %v82 = vpack.c.b16 %v70, %v69
  %v83 = vpack.c.b16 %v72, %v71
  %v84 = vpack.c.b16 %v74, %v73
  %v85 = vpack.c.b16 %v76, %v75
  %v86 = vpack.c.b16 %v78, %v77
  %95 = vmatprep.subr.bf16.mxu0 0
  %96 = vmatpush1.bf16.msra.mxu0 %v86
  %97 = vmatprep.subr.bf16.mxu0 0
  %98 = vmatpush1.bf16.msra.mxu0 %v85
  %99 = vmatprep.subr.bf16.mxu0 0
  %100 = vmatpush1.bf16.msra.mxu0 %v84
  %101 = vmatprep.subr.bf16.mxu0 0
  %102 = vmatpush1.bf16.msra.mxu0 %v83
  %103 = vmatprep.subr.bf16.mxu0 0
  %104 = vmatpush1.bf16.msra.mxu0 %v82
  %105 = vmatprep.subr.bf16.mxu0 0
  %106 = vmatpush1.bf16.msra.mxu0 %v81
  %107 = vmatprep.subr.bf16.mxu0 0
  %108 = vmatpush1.bf16.msra.mxu0 %v80
  %109 = vmatprep.subr.bf16.mxu0 0
  %110 = vmatpush1.bf16.msra.mxu0 %v79
  %111 = vmatprep.subr.bf16.mxu0 0
  %112 = vmatpush2.bf16.msra.mxu0 0
  %113 = vmatprep.subr.bf16.mxu0 0
  %114 = vmatpush2.bf16.msra.mxu0 0
  %115 = vmatprep.subr.bf16.mxu0 0
  %116 = vmatpush2.bf16.msra.mxu0 0
  %117 = vmatprep.subr.bf16.mxu0 0
  %118 = vmatpush2.bf16.msra.mxu0 0
  %119 = vmatprep.subr.bf16.mxu0 0
  %120 = vmatpush2.bf16.msra.mxu0 0
  %121 = vmatprep.subr.bf16.mxu0 0
  %122 = vmatpush2.bf16.msra.mxu0 0
  %123 = vmatprep.subr.bf16.mxu0 0
  %124 = vmatpush2.bf16.msra.mxu0 0
  %125 = vmatprep.subr.bf16.mxu0 0
  %126 = vmatpush2.bf16.msra.mxu0 0
  %127 = vmatprep.mubr.bf16.mxu0 0
  %128 = vmatmul.mubr.bf16.gmra.mxu0 %v23
  %v129 = vpop.f32.mrf.mxu0
  %v130 = vadd.f32 %v45, %v129
  %v131 = vpop.f32.mrf.mxu0
  %v132 = vpop.f32.mrf.mxu0
  %v133 = vadd.f32 %v45, %v132
  %v134 = vpop.f32.mrf.mxu0
  %135 = vdwg.mxu0
  %v136 = vmax.f32 %v130, 0.0
  %v137 = vmax.f32 %v133, 0.0
  %v138 = vpack.c.bf16 %v137, %v136
  %v139 = vld [vmem:[%s3] sm:$0xf]
  %v140 = vld [vmem:[%s3 + $0x4] sm:$0xf]
  %v141 = vld [vmem:[%s3 + $0x8] sm:$0xf]
  %v142 = vld [vmem:[%s3 + $0xc] sm:$0xf]
  %v143 = vld [vmem:[%s3 + $0x10] sm:$0xf]
  %v144 = vld [vmem:[%s3 + $0x14] sm:$0xf]
  %v145 = vld [vmem:[%s3 + $0x18] sm:$0xf]
  %v146 = vld [vmem:[%s3 + $0x1c] sm:$0xf]
  %v147 = vld [vmem:[%s3 + $0x20] sm:$0xf]
  %v148 = vld [vmem:[%s3 + $0x24] sm:$0xf]
  %v149 = vld [vmem:[%s3 + $0x28] sm:$0xf]
  %v150 = vld [vmem:[%s3 + $0x2c] sm:$0xf]
  %v151 = vld [vmem:[%s3 + $0x30] sm:$0xf]
  %v152 = vld [vmem:[%s3 + $0x34] sm:$0xf]
  %v153 = vld [vmem:[%s3 + $0x38] sm:$0xf]
  %v154 = vld [vmem:[%s3 + $0x3c] sm:$0xf]
  %v155 = vld [vmem:[%s4] sm:$0x1]
  %v157 = vlaneseq
  %v158 = vshrl.u32 %v157, 7
  %v159 = vsub.s32 0, %v158
  %v160 = vrot.slane %v155, %v159
  %v178 = vunpack.c.l.b16 %v139
  %v179 = vunpack.c.l.b16 %v140
  %v180 = vunpack.c.l.b16 %v141
  %v181 = vunpack.c.l.b16 %v142
  %v182 = vunpack.c.l.b16 %v143
  %v183 = vunpack.c.l.b16 %v144
  %v184 = vunpack.c.l.b16 %v145
  %v185 = vunpack.c.l.b16 %v146
  %v186 = vunpack.c.l.b16 %v147
  %v187 = vunpack.c.l.b16 %v148
  %v188 = vunpack.c.l.b16 %v149
  %v189 = vunpack.c.l.b16 %v150
  %v190 = vunpack.c.l.b16 %v151
  %v191 = vunpack.c.l.b16 %v152
  %v192 = vunpack.c.l.b16 %v153
  %v193 = vunpack.c.l.b16 %v154
  %v194 = vpack.c.b16 %v179, %v178
  %v195 = vpack.c.b16 %v181, %v180
  %v196 = vpack.c.b16 %v183, %v182
  %v197 = vpack.c.b16 %v185, %v184
  %v198 = vpack.c.b16 %v187, %v186
  %v199 = vpack.c.b16 %v189, %v188
  %v200 = vpack.c.b16 %v191, %v190
  %v201 = vpack.c.b16 %v193, %v192
  %210 = vmatprep.subr.bf16.mxu0 0
  %211 = vmatpush1.bf16.msra.mxu0 %v201
  %212 = vmatprep.subr.bf16.mxu0 0
  %213 = vmatpush1.bf16.msra.mxu0 %v200
  %214 = vmatprep.subr.bf16.mxu0 0
  %215 = vmatpush1.bf16.msra.mxu0 %v199
  %216 = vmatprep.subr.bf16.mxu0 0
  %217 = vmatpush1.bf16.msra.mxu0 %v198
  %218 = vmatprep.subr.bf16.mxu0 0
  %219 = vmatpush1.bf16.msra.mxu0 %v197
  %220 = vmatprep.subr.bf16.mxu0 0
  %221 = vmatpush1.bf16.msra.mxu0 %v196
  %222 = vmatprep.subr.bf16.mxu0 0
  %223 = vmatpush1.bf16.msra.mxu0 %v195
  %224 = vmatprep.subr.bf16.mxu0 0
  %225 = vmatpush1.bf16.msra.mxu0 %v194
  %226 = vmatprep.subr.bf16.mxu0 0
  %227 = vmatpush2.bf16.msra.mxu0 0
  %228 = vmatprep.subr.bf16.mxu0 0
  %229 = vmatpush2.bf16.msra.mxu0 0
  %230 = vmatprep.subr.bf16.mxu0 0
  %231 = vmatpush2.bf16.msra.mxu0 0
  %232 = vmatprep.subr.bf16.mxu0 0
  %233 = vmatpush2.bf16.msra.mxu0 0
  %234 = vmatprep.subr.bf16.mxu0 0
  %235 = vmatpush2.bf16.msra.mxu0 0
  %236 = vmatprep.subr.bf16.mxu0 0
  %237 = vmatpush2.bf16.msra.mxu0 0
  %238 = vmatprep.subr.bf16.mxu0 0
  %239 = vmatpush2.bf16.msra.mxu0 0
  %240 = vmatprep.subr.bf16.mxu0 0
  %241 = vmatpush2.bf16.msra.mxu0 0
  %242 = vmatprep.mubr.bf16.mxu0 0
  %243 = vmatmul.mubr.bf16.gmra.mxu0 %v138
  %v244 = vpop.f32.mrf.mxu0
  %v245 = vadd.f32 %v160, %v244
  %v246 = vpop.f32.mrf.mxu0
  %v247 = vpop.f32.mrf.mxu0
  %v248 = vadd.f32 %v160, %v247
  %v249 = vpop.f32.mrf.mxu0
  %250 = vdwg.mxu0
  %251 = vst [vmem:[%s5] sm:$0xff] %v245
  %252 = vst [vmem:[%s5 + $0x8] sm:$0xff] %v248
  // Predicated region
  $region22: #{feedforward_net.1} parent=0 // pred_check
    _
  $region23: #{feedforward_net.1} parent=0 // pred_check_branch
    %254 = sbr.rel (0) target = $region25
  $region24: #{feedforward_net.1} parent=0 // pred_region
    _
  $region25: #{feedforward_net.1} parent=0 // pred_fallthru
    _
  // Predicated region
  $region26: #{feedforward_net.1} parent=0 // pred_check
    _
  $region27: #{feedforward_net.1} parent=0 // pred_check_branch
    %256 = sbr.rel (0) target = $region29
  $region28: #{feedforward_net.1} parent=0 // pred_region
    _
  $region29: #{feedforward_net.1} parent=0 // pred_fallthru
    _

// kernel: feedforward_net.1
$region0: #{feedforward_net.1}
  #allocation0 [shape = 'u32[]', space=smem, size = 0x4, offset = 0x4, fixed_abs, tag = 'smem constant byte address 0x4 - core index']
  #allocation1 [shape = 'u32[144,128]{1,0:T(1,128)}', space=vmem, size = 0x12000, scoped, tag = 'internal scratch']
  %s0 = inlined_call_operand.vmem [shape: f32[16,128], index: 0, kind: input, shape index: {}]
  %s1 = inlined_call_operand.vmem [shape: bf16[128,128], index: 1, kind: input, shape index: {}]
  %s2 = inlined_call_operand.vmem [shape: f32[1,128], index: 2, kind: input, shape index: {}]
  %s3 = inlined_call_operand.vmem [shape: bf16[128,128], index: 3, kind: input, shape index: {}]
  %s4 = inlined_call_operand.vmem [shape: f32[1,128], index: 4, kind: input, shape index: {}]
  %s5 = inlined_call_operand.vmem [shape: f32[16,128], index: 5, kind: output, shape index: {}]
  %s6 = sld [smem:[#allocation0]]
  $region30: #{feedforward_net.1} parent=0
    _
  %s8 = ssub.s32 1, %s6
  %s9 = scalar_select 0, %s8, %s6
  // Predicated region
  $region2: #{feedforward_net.1} parent=0 // pred_check
    _
  $region3: #{feedforward_net.1} parent=0 // pred_check_branch
    %11 = sbr.rel (0) target = $region5
  $region4: #{feedforward_net.1} parent=0 // pred_region
    _
  $region5: #{feedforward_net.1} parent=0 // pred_fallthru
    _
  // Predicated region
  $region6: #{feedforward_net.1} parent=0 // pred_check
    _
  $region7: #{feedforward_net.1} parent=0 // pred_check_branch
    %13 = sbr.rel (0) target = $region9
  $region8: #{feedforward_net.1} parent=0 // pred_region
    _
  $region9: #{feedforward_net.1} parent=0 // pred_fallthru
    _
  // Predicated region
  $region10: #{feedforward_net.1} parent=0 // pred_check
    _
  $region11: #{feedforward_net.1} parent=0 // pred_check_branch
    %15 = sbr.rel (0) target = $region13
  $region12: #{feedforward_net.1} parent=0 // pred_region
    _
  $region13: #{feedforward_net.1} parent=0 // pred_fallthru
    _
  // Predicated region
  $region14: #{feedforward_net.1} parent=0 // pred_check
    _
  $region15: #{feedforward_net.1} parent=0 // pred_check_branch
    %17 = sbr.rel (0) target = $region17
  $region16: #{feedforward_net.1} parent=0 // pred_region
    _
  $region17: #{feedforward_net.1} parent=0 // pred_fallthru
    _
  // Predicated region
  $region18: #{feedforward_net.1} parent=0 // pred_check
    _
  $region19: #{feedforward_net.1} parent=0 // pred_check_branch
    %19 = sbr.rel (0) target = $region21
  $region20: #{feedforward_net.1} parent=0 // pred_region
    _
  $region21: #{feedforward_net.1} parent=0 // pred_fallthru
    _
  %v21 = vld [vmem:[%s0] sm:$0xff]
  %v22 = vld [vmem:[%s0 + $0x8] sm:$0xff]
  %v23 = vpack.c.bf16 %v22, %v21
  %v24 = vld [vmem:[%s1] sm:$0xf]
  %v25 = vld [vmem:[%s1 + $0x4] sm:$0xf]
  %v26 = vld [vmem:[%s1 + $0x8] sm:$0xf]
  %v27 = vld [vmem:[%s1 + $0xc] sm:$0xf]
  %v28 = vld [vmem:[%s1 + $0x10] sm:$0xf]
  %v29 = vld [vmem:[%s1 + $0x14] sm:$0xf]
  %v30 = vld [vmem:[%s1 + $0x18] sm:$0xf]
  %v31 = vld [vmem:[%s1 + $0x1c] sm:$0xf]
  %v32 = vld [vmem:[%s1 + $0x20] sm:$0xf]
  %v33 = vld [vmem:[%s1 + $0x24] sm:$0xf]
  %v34 = vld [vmem:[%s1 + $0x28] sm:$0xf]
  %v35 = vld [vmem:[%s1 + $0x2c] sm:$0xf]
  %v36 = vld [vmem:[%s1 + $0x30] sm:$0xf]
  %v37 = vld [vmem:[%s1 + $0x34] sm:$0xf]
  %v38 = vld [vmem:[%s1 + $0x38] sm:$0xf]
  %v39 = vld [vmem:[%s1 + $0x3c] sm:$0xf]
  %v40 = vld [vmem:[%s2] sm:$0x1]
  %v42 = vlaneseq
  %v43 = vshrl.u32 %v42, 7
  %v44 = vsub.s32 0, %v43
  %v45 = vrot.slane %v40, %v44
  %v63 = vunpack.c.l.b16 %v24
  %v64 = vunpack.c.l.b16 %v25
  %v65 = vunpack.c.l.b16 %v26
  %v66 = vunpack.c.l.b16 %v27
  %v67 = vunpack.c.l.b16 %v28
  %v68 = vunpack.c.l.b16 %v29
  %v69 = vunpack.c.l.b16 %v30
  %v70 = vunpack.c.l.b16 %v31
  %v71 = vunpack.c.l.b16 %v32
  %v72 = vunpack.c.l.b16 %v33
  %v73 = vunpack.c.l.b16 %v34
  %v74 = vunpack.c.l.b16 %v35
  %v75 = vunpack.c.l.b16 %v36
  %v76 = vunpack.c.l.b16 %v37
  %v77 = vunpack.c.l.b16 %v38
  %v78 = vunpack.c.l.b16 %v39
  %v79 = vpack.c.b16 %v64, %v63
  %v80 = vpack.c.b16 %v66, %v65
  %v81 = vpack.c.b16 %v68, %v67
  %v82 = vpack.c.b16 %v70, %v69
  %v83 = vpack.c.b16 %v72, %v71
  %v84 = vpack.c.b16 %v74, %v73
  %v85 = vpack.c.b16 %v76, %v75
  %v86 = vpack.c.b16 %v78, %v77
  %95 = vmatprep.subr.bf16.mxu0 0
  %96 = vmatpush1.bf16.msra.mxu0 %v86
  %97 = vmatprep.subr.bf16.mxu0 0
  %98 = vmatpush1.bf16.msra.mxu0 %v85
  %99 = vmatprep.subr.bf16.mxu0 0
  %100 = vmatpush1.bf16.msra.mxu0 %v84
  %101 = vmatprep.subr.bf16.mxu0 0
  %102 = vmatpush1.bf16.msra.mxu0 %v83
  %103 = vmatprep.subr.bf16.mxu0 0
  %104 = vmatpush1.bf16.msra.mxu0 %v82
  %105 = vmatprep.subr.bf16.mxu0 0
  %106 = vmatpush1.bf16.msra.mxu0 %v81
  %107 = vmatprep.subr.bf16.mxu0 0
  %108 = vmatpush1.bf16.msra.mxu0 %v80
  %109 = vmatprep.subr.bf16.mxu0 0
  %110 = vmatpush1.bf16.msra.mxu0 %v79
  %111 = vmatprep.subr.bf16.mxu0 0
  %112 = vmatpush2.bf16.msra.mxu0 0
  %113 = vmatprep.subr.bf16.mxu0 0
  %114 = vmatpush2.bf16.msra.mxu0 0
  %115 = vmatprep.subr.bf16.mxu0 0
  %116 = vmatpush2.bf16.msra.mxu0 0
  %117 = vmatprep.subr.bf16.mxu0 0
  %118 = vmatpush2.bf16.msra.mxu0 0
  %119 = vmatprep.subr.bf16.mxu0 0
  %120 = vmatpush2.bf16.msra.mxu0 0
  %121 = vmatprep.subr.bf16.mxu0 0
  %122 = vmatpush2.bf16.msra.mxu0 0
  %123 = vmatprep.subr.bf16.mxu0 0
  %124 = vmatpush2.bf16.msra.mxu0 0
  %125 = vmatprep.subr.bf16.mxu0 0
  %126 = vmatpush2.bf16.msra.mxu0 0
  %127 = vmatprep.mubr.bf16.mxu0 0
  %128 = vmatmul.mubr.bf16.gmra.mxu0 %v23
  %v129 = vpop.f32.mrf.mxu0
  %v130 = vadd.f32 %v45, %v129
  %v131 = vpop.f32.mrf.mxu0
  %v132 = vpop.f32.mrf.mxu0
  %v133 = vadd.f32 %v45, %v132
  %v134 = vpop.f32.mrf.mxu0
  %135 = vdwg.mxu0
  %v136 = vmax.f32 %v130, 0.0
  %v137 = vmax.f32 %v133, 0.0
  %v138 = vpack.c.bf16 %v137, %v136
  %v139 = vld [vmem:[%s3] sm:$0xf]
  %v140 = vld [vmem:[%s3 + $0x4] sm:$0xf]
  %v141 = vld [vmem:[%s3 + $0x8] sm:$0xf]
  %v142 = vld [vmem:[%s3 + $0xc] sm:$0xf]
  %v143 = vld [vmem:[%s3 + $0x10] sm:$0xf]
  %v144 = vld [vmem:[%s3 + $0x14] sm:$0xf]
  %v145 = vld [vmem:[%s3 + $0x18] sm:$0xf]
  %v146 = vld [vmem:[%s3 + $0x1c] sm:$0xf]
  %v147 = vld [vmem:[%s3 + $0x20] sm:$0xf]
  %v148 = vld [vmem:[%s3 + $0x24] sm:$0xf]
  %v149 = vld [vmem:[%s3 + $0x28] sm:$0xf]
  %v150 = vld [vmem:[%s3 + $0x2c] sm:$0xf]
  %v151 = vld [vmem:[%s3 + $0x30] sm:$0xf]
  %v152 = vld [vmem:[%s3 + $0x34] sm:$0xf]
  %v153 = vld [vmem:[%s3 + $0x38] sm:$0xf]
  %v154 = vld [vmem:[%s3 + $0x3c] sm:$0xf]
  %v155 = vld [vmem:[%s4] sm:$0x1]
  %v157 = vlaneseq
  %v158 = vshrl.u32 %v157, 7
  %v159 = vsub.s32 0, %v158
  %v160 = vrot.slane %v155, %v159
  %v178 = vunpack.c.l.b16 %v139
  %v179 = vunpack.c.l.b16 %v140
  %v180 = vunpack.c.l.b16 %v141
  %v181 = vunpack.c.l.b16 %v142
  %v182 = vunpack.c.l.b16 %v143
  %v183 = vunpack.c.l.b16 %v144
  %v184 = vunpack.c.l.b16 %v145
  %v185 = vunpack.c.l.b16 %v146
  %v186 = vunpack.c.l.b16 %v147
  %v187 = vunpack.c.l.b16 %v148
  %v188 = vunpack.c.l.b16 %v149
  %v189 = vunpack.c.l.b16 %v150
  %v190 = vunpack.c.l.b16 %v151
  %v191 = vunpack.c.l.b16 %v152
  %v192 = vunpack.c.l.b16 %v153
  %v193 = vunpack.c.l.b16 %v154
  %v194 = vpack.c.b16 %v179, %v178
  %v195 = vpack.c.b16 %v181, %v180
  %v196 = vpack.c.b16 %v183, %v182
  %v197 = vpack.c.b16 %v185, %v184
  %v198 = vpack.c.b16 %v187, %v186
  %v199 = vpack.c.b16 %v189, %v188
  %v200 = vpack.c.b16 %v191, %v190
  %v201 = vpack.c.b16 %v193, %v192
  %210 = vmatprep.subr.bf16.mxu0 0
  %211 = vmatpush1.bf16.msra.mxu0 %v201
  %212 = vmatprep.subr.bf16.mxu0 0
  %213 = vmatpush1.bf16.msra.mxu0 %v200
  %214 = vmatprep.subr.bf16.mxu0 0
  %215 = vmatpush1.bf16.msra.mxu0 %v199
  %216 = vmatprep.subr.bf16.mxu0 0
  %217 = vmatpush1.bf16.msra.mxu0 %v198
  %218 = vmatprep.subr.bf16.mxu0 0
  %219 = vmatpush1.bf16.msra.mxu0 %v197
  %220 = vmatprep.subr.bf16.mxu0 0
  %221 = vmatpush1.bf16.msra.mxu0 %v196
  %222 = vmatprep.subr.bf16.mxu0 0
  %223 = vmatpush1.bf16.msra.mxu0 %v195
  %224 = vmatprep.subr.bf16.mxu0 0
  %225 = vmatpush1.bf16.msra.mxu0 %v194
  %226 = vmatprep.subr.bf16.mxu0 0
  %227 = vmatpush2.bf16.msra.mxu0 0
  %228 = vmatprep.subr.bf16.mxu0 0
  %229 = vmatpush2.bf16.msra.mxu0 0
  %230 = vmatprep.subr.bf16.mxu0 0
  %231 = vmatpush2.bf16.msra.mxu0 0
  %232 = vmatprep.subr.bf16.mxu0 0
  %233 = vmatpush2.bf16.msra.mxu0 0
  %234 = vmatprep.subr.bf16.mxu0 0
  %235 = vmatpush2.bf16.msra.mxu0 0
  %236 = vmatprep.subr.bf16.mxu0 0
  %237 = vmatpush2.bf16.msra.mxu0 0
  %238 = vmatprep.subr.bf16.mxu0 0
  %239 = vmatpush2.bf16.msra.mxu0 0
  %240 = vmatprep.subr.bf16.mxu0 0
  %241 = vmatpush2.bf16.msra.mxu0 0
  %242 = vmatprep.mubr.bf16.mxu0 0
  %243 = vmatmul.mubr.bf16.gmra.mxu0 %v138
  %v244 = vpop.f32.mrf.mxu0
  %v245 = vadd.f32 %v160, %v244
  %v246 = vpop.f32.mrf.mxu0
  %v247 = vpop.f32.mrf.mxu0
  %v248 = vadd.f32 %v160, %v247
  %v249 = vpop.f32.mrf.mxu0
  %250 = vdwg.mxu0
  %251 = vst [vmem:[%s5] sm:$0xff] %v245
  %252 = vst [vmem:[%s5 + $0x8] sm:$0xff] %v248
  // Predicated region
  $region22: #{feedforward_net.1} parent=0 // pred_check
    _
  $region23: #{feedforward_net.1} parent=0 // pred_check_branch
    %254 = sbr.rel (0) target = $region25
  $region24: #{feedforward_net.1} parent=0 // pred_region
    _
  $region25: #{feedforward_net.1} parent=0 // pred_fallthru
    _
  // Predicated region
  $region26: #{feedforward_net.1} parent=0 // pred_check
    _
  $region27: #{feedforward_net.1} parent=0 // pred_check_branch
    %256 = sbr.rel (0) target = $region29
  $region28: #{feedforward_net.1} parent=0 // pred_region
    _
  $region29: #{feedforward_net.1} parent=0 // pred_fallthru
    _

</llo_original>
